<compile_context>
chip_gen: v7x
topology: tpu7x:2x2x1
jax: 0.10.0
libtpu: 0.0.40
codegen_flags: <defaults>
</compile_context>

<pallas_src>
import functools
import math
from typing import NamedTuple

import jax
import jax.numpy as jnp
from jax.experimental import pallas as pl
from jax.experimental.pallas import tpu as pltpu


def _round_up(x, m):
    return (x + m - 1) // m * m


def _vmem_capacity_bytes():
    """Physical VMEM of the attached TPU (fallback: assume v7x's 64 MiB)."""
    try:
        cap = int(pltpu.get_tpu_info().vmem_capacity_bytes)
        if cap > 0:
            return cap
    except Exception:
        pass
    return 64 * 1024 * 1024


def _vmem_budget_bytes():
    # Leave 8 MiB headroom for compiler-internal scratch / semaphores.
    return max(_vmem_capacity_bytes() - (8 << 20), 16 << 20)


def _vmem_estimate(tm, tn, dp, npt, x_bytes, out_bytes, resident):
    """Rough per-step VMEM footprint, including pipeline buffering."""
    w_bufs = 1 if resident else 2          # resident W/bias use pl.Buffered(1)
    w_cols = npt if resident else tn
    est = (2 * tm * dp * x_bytes           # x row tiles (double buffered)
           + 2 * tm * tn * out_bytes       # output tiles
           + w_bufs * dp * w_cols * 2      # bf16 weight slab(s)
           + w_bufs * tn * 4               # fused bias
           + 2 * dp * 4)                   # gamma
    if not resident:
        est += tm * dp * 2                 # bf16 normalized-x scratch
    return est


def _buffered_once_spec(shape, index_map):
    """Constant-index BlockSpec, single-buffered when the API allows it."""
    try:
        return pl.BlockSpec(shape, index_map, pipeline_mode=pl.Buffered(1))
    except Exception:
        return pl.BlockSpec(shape, index_map)


def _ln_normalize(x_ref, g_ref, d_actual, eps):
    """f32 LayerNorm stats + gamma scale; returns bf16 normalized activations."""
    x = x_ref[...].astype(jnp.float32)
    inv_d = jnp.float32(1.0 / d_actual)
    # Padded lanes of x are zero, so sums over the padded width equal sums over
    # the true D; E[x^2] - mean^2 is therefore exact w.r.t. D (max() guards the
    # small f32 cancellation).
    mean = jnp.sum(x, axis=-1, keepdims=True) * inv_d
    msq = jnp.sum(x * x, axis=-1, keepdims=True) * inv_d
    var = jnp.maximum(msq - mean * mean, 0.0)
    inv = jax.lax.rsqrt(var + jnp.float32(eps))
    # gamma == 0 in padded lanes -> xn == 0 there -> padded K contributes 0.
    return ((x - mean) * inv * g_ref[...]).astype(jnp.bfloat16)


def _prenorm_resident_kernel(x_ref, g_ref, w_ref, fb_ref, o_ref, *, d_actual, eps):
    # Full output width per step; W / fused bias are resident (one DMA per call).
    xn = _ln_normalize(x_ref, g_ref, d_actual, eps)
    y = jnp.dot(xn, w_ref[...], preferred_element_type=jnp.float32)
    o_ref[...] = (y + fb_ref[...]).astype(o_ref.dtype)


def _prenorm_tiled_kernel(x_ref, g_ref, w_ref, fb_ref, o_ref, xn_ref, *, d_actual, eps):
    # Column-tiled W.  LayerNorm runs once per row tile (j == 0); that first
    # matmul is fed from the live value (the scratch store is a side write),
    # subsequent column tiles reuse the bf16 scratch.
    j = pl.program_id(1)

    @pl.when(j == 0)
    def _():
        xn = _ln_normalize(x_ref, g_ref, d_actual, eps)
        xn_ref[...] = xn
        y = jnp.dot(xn, w_ref[...], preferred_element_type=jnp.float32)
        o_ref[...] = (y + fb_ref[...]).astype(o_ref.dtype)

    @pl.when(j > 0)
    def _():
        y = jnp.dot(xn_ref[...], w_ref[...], preferred_element_type=jnp.float32)
        o_ref[...] = (y + fb_ref[...]).astype(o_ref.dtype)


class PreNormParams(NamedTuple):
    gamma: jax.Array       # (1, Dp)  f32, zero-padded LayerNorm gamma
    weight: jax.Array      # (Dp, Npt) bf16, zero-padded linear weight
    fused_bias: jax.Array  # (1, Npt) f32 == beta @ W + b (zero-padded)
    d: int                 # true feature dim
    n: int                 # true output dim
    tn: int                # output-column tile
    resident: bool         # True -> W held fully resident in VMEM


def make_prenorm_params(gamma, beta, w, b, *, tn=None):
    """One-time (init) parameter prep for fused PreNorm(LayerNorm + Linear).

    Hoists the bf16 cast, lane padding and beta/bias folding out of the
    per-call path and decides the W tiling (resident vs. column-streamed) from
    the chip's VMEM budget.  Pass `tn` to force a specific column tile.
    """
    d, n = w.shape
    assert gamma.shape == (d,) and beta.shape == (d,) and b.shape == (n,)
    dp = _round_up(d, 128)
    np_ = _round_up(n, 128)
    budget = _vmem_budget_bytes()

    w_bf16 = w.astype(jnp.bfloat16)
    # Fold LayerNorm beta + linear bias:  y = (xc*inv*gamma) @ W + (beta@W + b).
    # Computed against the bf16 weight so it matches the kernel's matmul.
    fused_bias = (beta.astype(jnp.float32) @ w_bf16.astype(jnp.float32)
                  + b.astype(jnp.float32)).reshape(1, n)

    if tn is None:
        # Resident W if the single-buffered weight + modest row tiles fit.
        if _vmem_estimate(128, np_, dp, np_, 4, 4, resident=True) <= budget:
            tn, resident = np_, True
        else:
            resident = False
            tn = min(128, np_)
            for cand in (512, 256):
                c = min(cand, np_)
                if _vmem_estimate(128, c, dp, _round_up(np_, c), 4, 4,
                                  resident=False) <= budget:
                    tn = c
                    break
    else:
        tn = min(_round_up(tn, 128), np_)
        resident = tn == np_
    npt = _round_up(np_, tn)

    weight = jnp.pad(w_bf16, ((0, dp - d), (0, npt - n)))
    fb = jnp.pad(fused_bias, ((0, 0), (0, npt - n)))
    g2 = jnp.pad(gamma.astype(jnp.float32).reshape(1, d), ((0, 0), (0, dp - d)))
    return PreNormParams(g2, weight, fb, d, n, tn, resident)


def prenorm_apply(x, params, *, eps=1e-5):
    """Fused y = Linear(LayerNorm(x)).  x: (..., D) -> (..., N)."""
    d, n = params.d, params.n
    assert x.shape[-1] == d
    lead = x.shape[:-1]
    rows = math.prod(lead)
    dp, npt = params.weight.shape
    tn, resident = params.tn, params.resident
    budget = _vmem_budget_bytes()
    out_dtype = x.dtype

    # --- row tile: largest that fits the per-chip VMEM budget ---------------
    tm_cap = _round_up(rows, 16)
    cands = sorted({min(c, tm_cap) for c in (1024, 512, 256, 128, 64, 32, 16)},
                   reverse=True)
    tm = cands[-1]
    for c in cands:
        if _vmem_estimate(c, tn, dp, npt, x.dtype.itemsize, out_dtype.itemsize,
                          resident) <= budget:
            tm = c
            break
    # v7x megacore: with a resident W (no re-stream penalty) make sure the
    # "parallel" row axis has at least two tiles for small batches.
    if resident and rows >= 32 and _round_up(rows, tm) // tm < 2:
        tm = max(16, min(tm, _round_up((rows + 1) // 2, 16)))
    rows_p = _round_up(rows, tm)

    # --- inputs (skip the x pad copy in the common aligned case) ------------
    x2 = x.reshape(rows, d)
    if dp != d or rows_p != rows:
        # TODO(synk): mask padded lanes in-kernel (broadcasted_iota < d) to
        # avoid this pad copy for ragged D / rows as well.
        x2 = jnp.pad(x2, ((0, rows_p - rows), (0, dp - d)))

    est = _vmem_estimate(tm, tn, dp, npt, x2.dtype.itemsize, out_dtype.itemsize,
                         resident)
    cap = max(_vmem_capacity_bytes() - (8 << 20), 16 << 20)
    vmem_limit = int(min(max(est + (4 << 20), 32 << 20), cap))

    if resident:
        grid = (rows_p // tm,)
        kernel = functools.partial(_prenorm_resident_kernel, d_actual=d, eps=eps)
        grid_spec = pltpu.PrefetchScalarGridSpec(
            num_scalar_prefetch=0,
            grid=grid,
            in_specs=[
                pl.BlockSpec((tm, dp), lambda i: (i, 0)),           # x rows
                pl.BlockSpec((1, dp), lambda i: (0, 0)),            # gamma
                _buffered_once_spec((dp, npt), lambda i: (0, 0)),   # resident W
                _buffered_once_spec((1, npt), lambda i: (0, 0)),    # fused bias
            ],
            out_specs=pl.BlockSpec((tm, npt), lambda i: (i, 0)),
        )
        dim_sem = ("parallel",)
    else:
        grid = (rows_p // tm, npt // tn)
        kernel = functools.partial(_prenorm_tiled_kernel, d_actual=d, eps=eps)
        grid_spec = pltpu.PrefetchScalarGridSpec(
            num_scalar_prefetch=0,
            grid=grid,
            in_specs=[
                pl.BlockSpec((tm, dp), lambda i, j: (i, 0)),  # x (1 fetch / i)
                pl.BlockSpec((1, dp), lambda i, j: (0, 0)),   # gamma
                pl.BlockSpec((dp, tn), lambda i, j: (0, j)),  # bf16 W slab
                pl.BlockSpec((1, tn), lambda i, j: (0, j)),   # fused bias
            ],
            out_specs=pl.BlockSpec((tm, tn), lambda i, j: (i, j)),
            scratch_shapes=[pltpu.VMEM((tm, dp), jnp.bfloat16)],
        )
        # Column axis must stay "arbitrary": only j == 0 fills the xn scratch.
        dim_sem = ("parallel", "arbitrary")

    out = pl.pallas_call(
        kernel,
        out_shape=jax.ShapeDtypeStruct((rows_p, npt), out_dtype),
        grid_spec=grid_spec,
        compiler_params=pltpu.CompilerParams(
            dimension_semantics=dim_sem,
            vmem_limit_bytes=vmem_limit,
        ),
    )(x2, params.gamma, params.weight, params.fused_bias)
    return out[:rows, :n].reshape(*lead, n)


def prenorm_linear(x, gamma, beta, w, b, *, eps=1e-5, tn=None):
    """One-shot convenience wrapper.  Prefer make_prenorm_params() once at init
    plus prenorm_apply() per call so the weight cast/pad is not repeated."""
    return prenorm_apply(x, make_prenorm_params(gamma, beta, w, b, tn=tn), eps=eps)


def prenorm_ref(x, gamma, beta, w, b, eps=1e-5):
    xf = x.astype(jnp.float32)
    mean = jnp.mean(xf, axis=-1, keepdims=True)
    var = jnp.mean((xf - mean) ** 2, axis=-1, keepdims=True)
    xn = (xf - mean) * jax.lax.rsqrt(var + eps) * gamma + beta
    return (xn @ w + b).astype(x.dtype)


if __name__ == "__main__":
    key = jax.random.PRNGKey(0)
    B, S, D = 2, 8, 32                     # batch=2, seq=8, hidden=32
    k_x, k_g, k_bt, k_w, k_b, k_w2, k_b2 = jax.random.split(key, 7)

    x = jax.random.normal(k_x, (B, S, D), dtype=jnp.float32)
    gamma = 1.0 + 0.1 * jax.random.normal(k_g, (D,), dtype=jnp.float32)
    beta = 0.1 * jax.random.normal(k_bt, (D,), dtype=jnp.float32)

    # --- Case 1: PreNorm(LayerNorm(dim), Linear(dim, dim)) — resident-W path.
    # Linear weight stored as (in, out): y = x @ w + b (== PyTorch x @ W.T).
    w = jax.random.normal(k_w, (D, D), dtype=jnp.float32) / jnp.sqrt(D)
    b = 0.01 * jax.random.normal(k_b, (D,), dtype=jnp.float32)
    params = make_prenorm_params(gamma, beta, w, b)       # init-time prep
    y = prenorm_apply(x, params)
    jax.block_until_ready(y)
    y_ref = prenorm_ref(x, gamma, beta, w, b)
    assert y.shape == y_ref.shape
    # bf16 MXU path -> loosened tolerance vs the f32 reference.
    assert jnp.allclose(y, y_ref, atol=3e-2, rtol=3e-2), "mismatch (resident path)"

    # --- Case 2: wider fn = Linear(dim, 8*dim); force the column-tiled path.
    N2 = 8 * D
    w2 = jax.random.normal(k_w2, (D, N2), dtype=jnp.float32) / jnp.sqrt(D)
    b2 = 0.01 * jax.random.normal(k_b2, (N2,), dtype=jnp.float32)
    params2 = make_prenorm_params(gamma, beta, w2, b2, tn=128)
    y2 = prenorm_apply(x, params2)
    jax.block_until_ready(y2)
    y2_ref = prenorm_ref(x, gamma, beta, w2, b2)
    assert y2.shape == y2_ref.shape
    assert jnp.allclose(y2, y2_ref, atol=3e-2, rtol=3e-2), "mismatch (tiled path)"

    print("KERNEL_OK")
</pallas_src>

<mosaic_0001>
module attributes {stable_mosaic.version = 11 : i64} {
  func.func @_prenorm_resident_kernel(%arg0: i32, %arg1: memref<16x128xf32, #tpu.memory_space<vmem>>, %arg2: memref<1x128xf32, #tpu.memory_space<vmem>>, %arg3: memref<128x128xbf16, #tpu.memory_space<vmem>>, %arg4: memref<1x128xf32, #tpu.memory_space<vmem>>, %arg5: memref<16x128xf32, #tpu.memory_space<vmem>>) attributes {dimension_semantics = [#tpu.dimension_semantics<parallel>], iteration_bounds = array<i64: 1>, scalar_prefetch = 0 : i64, scratch_operands = 0 : i64, tpu.core_type = #tpu.core_type<tc>, window_params = [{transform_indices = @transform_0, window_bounds = array<i64: 16, 128>}, {pipeline_mode = #tpu.pipeline_mode<synchronous>, transform_indices = @transform_1, window_bounds = array<i64: 1, 128>}, {pipeline_mode = #tpu.pipeline_mode<synchronous>, transform_indices = @transform_2, window_bounds = array<i64: 128, 128>}, {pipeline_mode = #tpu.pipeline_mode<synchronous>, transform_indices = @transform_3, window_bounds = array<i64: 1, 128>}, {transform_indices = @transform_4, window_bounds = array<i64: 16, 128>}]} {
    %c0 = arith.constant 0 : index
    %c0_0 = arith.constant 0 : index
    %0 = vector.load %arg1[%c0, %c0_0] : memref<16x128xf32, #tpu.memory_space<vmem>>, vector<16x128xf32>
    %cst = arith.constant dense<0.000000e+00> : vector<16xf32>
    %1 = vector.multi_reduction <add>, %0, %cst [1] : vector<16x128xf32> to vector<16xf32>
    %2 = vector.shape_cast %1 : vector<16xf32> to vector<16x1xf32>
    %cst_1 = arith.constant 3.125000e-02 : f32
    %3 = vector.broadcast %cst_1 : f32 to vector<16x1xf32>
    %4 = arith.mulf %2, %3 : vector<16x1xf32>
    %5 = arith.mulf %0, %0 : vector<16x128xf32>
    %cst_2 = arith.constant dense<0.000000e+00> : vector<16xf32>
    %6 = vector.multi_reduction <add>, %5, %cst_2 [1] : vector<16x128xf32> to vector<16xf32>
    %7 = vector.shape_cast %6 : vector<16xf32> to vector<16x1xf32>
    %cst_3 = arith.constant 3.125000e-02 : f32
    %8 = vector.broadcast %cst_3 : f32 to vector<16x1xf32>
    %9 = arith.mulf %7, %8 : vector<16x1xf32>
    %10 = arith.mulf %4, %4 : vector<16x1xf32>
    %11 = arith.subf %9, %10 : vector<16x1xf32>
    %cst_4 = arith.constant 0.000000e+00 : f32
    %12 = vector.broadcast %cst_4 : f32 to vector<16x1xf32>
    %13 = arith.maximumf %11, %12 : vector<16x1xf32>
    %cst_5 = arith.constant 9.99999974E-6 : f32
    %14 = vector.broadcast %cst_5 : f32 to vector<16x1xf32>
    %15 = arith.addf %13, %14 : vector<16x1xf32>
    %16 = math.rsqrt %15 : vector<16x1xf32>
    %17 = vector.broadcast %4 : vector<16x1xf32> to vector<16x128xf32>
    %18 = arith.subf %0, %17 : vector<16x128xf32>
    %19 = vector.broadcast %16 : vector<16x1xf32> to vector<16x128xf32>
    %20 = arith.mulf %18, %19 : vector<16x128xf32>
    %c0_6 = arith.constant 0 : index
    %c0_7 = arith.constant 0 : index
    %21 = vector.load %arg2[%c0_6, %c0_7] : memref<1x128xf32, #tpu.memory_space<vmem>>, vector<1x128xf32>
    %22 = vector.broadcast %21 : vector<1x128xf32> to vector<16x128xf32>
    %23 = arith.mulf %20, %22 : vector<16x128xf32>
    %24 = arith.truncf %23 : vector<16x128xf32> to vector<16x128xbf16>
    %c0_8 = arith.constant 0 : index
    %c0_9 = arith.constant 0 : index
    %25 = vector.load %arg3[%c0_8, %c0_9] : memref<128x128xbf16, #tpu.memory_space<vmem>>, vector<128x128xbf16>
    %cst_10 = arith.constant dense<0.000000e+00> : vector<16x128xf32>
    %26 = tpu.matmul %24, %25, %cst_10 {dimension_numbers = #tpu.dot_dimension_numbers<[1], [0], [0], [1], [0, 0, 1, 1], [], []>} : vector<16x128xbf16>, vector<128x128xbf16>, vector<16x128xf32> -> vector<16x128xf32>
    %c0_11 = arith.constant 0 : index
    %c0_12 = arith.constant 0 : index
    %27 = vector.load %arg4[%c0_11, %c0_12] : memref<1x128xf32, #tpu.memory_space<vmem>>, vector<1x128xf32>
    %28 = vector.broadcast %27 : vector<1x128xf32> to vector<16x128xf32>
    %29 = arith.addf %26, %28 : vector<16x128xf32>
    %c0_13 = arith.constant 0 : index
    %c0_14 = arith.constant 0 : index
    %30 = vector.load %arg5[%c0_13, %c0_14] : memref<16x128xf32, #tpu.memory_space<vmem>>, vector<16x128xf32>
    tpu.vector_store %arg5[%c0_13, %c0_14], %29 {strides = array<i32>} : memref<16x128xf32, #tpu.memory_space<vmem>>, vector<16x128xf32>,
    return
  }
  func.func @transform_0(%arg0: i32) -> (i32, i32) {
    %c0_i32 = arith.constant 0 : i32
    %c0_i32_0 = arith.constant 0 : i32
    return %arg0, %c0_i32 : i32, i32
  }
  func.func @transform_1(%arg0: i32) -> (i32, i32) {
    %c0_i32 = arith.constant 0 : i32
    %c0_i32_0 = arith.constant 0 : i32
    %c0_i32_1 = arith.constant 0 : i32
    return %c0_i32, %c0_i32_0 : i32, i32
  }
  func.func @transform_2(%arg0: i32) -> (i32, i32) {
    %c0_i32 = arith.constant 0 : i32
    %c0_i32_0 = arith.constant 0 : i32
    %c0_i32_1 = arith.constant 0 : i32
    return %c0_i32, %c0_i32_0 : i32, i32
  }
  func.func @transform_3(%arg0: i32) -> (i32, i32) {
    %c0_i32 = arith.constant 0 : i32
    %c0_i32_0 = arith.constant 0 : i32
    %c0_i32_1 = arith.constant 0 : i32
    return %c0_i32, %c0_i32_0 : i32, i32
  }
  func.func @transform_4(%arg0: i32) -> (i32, i32) {
    %c0_i32 = arith.constant 0 : i32
    %c0_i32_0 = arith.constant 0 : i32
    return %arg0, %c0_i32 : i32, i32
  }
}

</mosaic_0001>

<llo_original>
// kernel: tpu_custom_call.1
$region0: #{tpu_custom_call.1}
  #allocation0 [shape = 'u32[]', space=smem, size = 0x4, offset = 0x4, fixed_abs, tag = 'smem constant byte address 0x4 - core index']
  #allocation1 [shape = 'u32[144,128]{1,0:T(1,128)}', space=vmem, size = 0x12000, scoped, tag = 'internal scratch']
  %s0 = inlined_call_operand.hbm [shape: f32[16,128], index: 0, kind: input, shape index: {}]
  %s1 = inlined_call_operand.vmem [shape: f32[1,128], index: 1, kind: input, shape index: {}]
  %s2 = inlined_call_operand.hbm [shape: bf16[128,128], index: 2, kind: input, shape index: {}]
  %s3 = inlined_call_operand.vmem [shape: f32[1,128], index: 3, kind: input, shape index: {}]
  %s4 = inlined_call_operand.hbm [shape: f32[16,128], index: 4, kind: output, shape index: {}]
  %s5 = sld [smem:[#allocation0]]
  $region34: #{tpu_custom_call.1} parent=0
    _
  %s7 = ssub.s32 1, %s5
  %s8 = scalar_select 0, %s7, %s5
  $region1: #{tpu_custom_call.1} parent=0
    #allocation2 [shape = 'u8[8192]{0}', space=vmem, size = 0x2000, scoped, tag = 'input window, operand 0, single buffered']
    #allocation3 [shape = 's32[1]{0}', space=sflag, size = 0x4, scoped, tag = 'scoped memory for tpu_custom_call.1']
    #allocation4 [shape = 's32[1]{0}', space=sflag, size = 0x4, scoped, tag = 'scoped memory for tpu_custom_call.1']
    #allocation5 [shape = 'u8[32768]{0}', space=vmem, size = 0x8000, scoped, tag = 'input window, operand 2, single buffered']
    #allocation6 [shape = 's32[1]{0}', space=sflag, size = 0x4, scoped, tag = 'scoped memory for tpu_custom_call.1']
    #allocation7 [shape = 'u8[8192]{0}', space=vmem, size = 0x2000, scoped, tag = 'output window, operand 0, single buffered']
    %9 = vsyncpa [#allocation3], 0
    %10 = vsyncpa [#allocation6], 0
    %11 = vsyncpa [#allocation4], 0
    // Predicated region
    $region2: #{tpu_custom_call.1} parent=1 // pred_check
      _
    $region3: #{tpu_custom_call.1} parent=1 // pred_check_branch
      %13 = sbr.rel (0) target = $region5
    $region4: #{tpu_custom_call.1} parent=1 // pred_region
      %s15 = ssub.s32 256, 256
      %16 = vsyncadd [#allocation3], %s15
      %s17 = sshll.u32 [#allocation2], 4
      %s18 = int_to_ptr.vmem [resolvable:$true] %s17
      %23 = dma.hbm_to_vmem [thread:$0]  %s0, 256, %s18, [#allocation3], 128, 128, 8
    $region5: #{tpu_custom_call.1} parent=1 // pred_fallthru
      _
    // Predicated region
    $region6: #{tpu_custom_call.1} parent=1 // pred_check
      _
    $region7: #{tpu_custom_call.1} parent=1 // pred_check_branch
      %25 = sbr.rel (0) target = $region9
    $region8: #{tpu_custom_call.1} parent=1 // pred_region
      _
    $region9: #{tpu_custom_call.1} parent=1 // pred_fallthru
      _
    // Predicated region
    $region10: #{tpu_custom_call.1} parent=1 // pred_check
      _
    $region11: #{tpu_custom_call.1} parent=1 // pred_check_branch
      %27 = sbr.rel (0) target = $region13
    $region12: #{tpu_custom_call.1} parent=1 // pred_region
      %s29 = ssub.s32 1024, 1024
      %30 = vsyncadd [#allocation6], %s29
      %s31 = sshll.u32 [#allocation5], 4
      %s32 = int_to_ptr.vmem [resolvable:$true] %s31
      %37 = dma.hbm_to_vmem [thread:$0]  %s2, 1024, %s32, [#allocation6], 64, 64, 4
    $region13: #{tpu_custom_call.1} parent=1 // pred_fallthru
      _
    // Predicated region
    $region14: #{tpu_custom_call.1} parent=1 // pred_check
      _
    $region15: #{tpu_custom_call.1} parent=1 // pred_check_branch
      %39 = sbr.rel (0) target = $region17
    $region16: #{tpu_custom_call.1} parent=1 // pred_region
      _
    $region17: #{tpu_custom_call.1} parent=1 // pred_fallthru
      _
    // Predicated region
    $region18: #{tpu_custom_call.1} parent=1 // pred_check
      _
    $region19: #{tpu_custom_call.1} parent=1 // pred_check_branch
      %41 = sbr.rel (0) target = $region21
    $region20: #{tpu_custom_call.1} parent=1 // pred_region
      %42 = dma.done [#allocation3], 256
    $region21: #{tpu_custom_call.1} parent=1 // pred_fallthru
      _
    // Predicated region
    $region22: #{tpu_custom_call.1} parent=1 // pred_check
      _
    $region23: #{tpu_custom_call.1} parent=1 // pred_check_branch
      %44 = sbr.rel (0) target = $region25
    $region24: #{tpu_custom_call.1} parent=1 // pred_region
      %45 = dma.done [#allocation6], 1024
    $region25: #{tpu_custom_call.1} parent=1 // pred_fallthru
      _
    %v47 = vld [vmem:[#allocation2] sm:$0xff]
    %v48 = vld [vmem:[#allocation2 + $0x8] sm:$0xff]
    %49 = vadd.xlane.f32.xlu0 %v47
    %v50 = vpop.xlane.xlu0 %49
    %51 = vadd.xlane.f32.xlu0 %v48
    %v52 = vpop.xlane.xlu0 %51
    %v53 = vmul.f32 %v50, 0.03125
    %v54 = vmul.f32 %v52, 0.03125
    %v55 = vmul.f32 %v47, %v47
    %v56 = vmul.f32 %v48, %v48
    %57 = vadd.xlane.f32.xlu0 %v55
    %v58 = vpop.xlane.xlu0 %57
    %59 = vadd.xlane.f32.xlu0 %v56
    %v60 = vpop.xlane.xlu0 %59
    %v61 = vmul.f32 %v58, 0.03125
    %v62 = vmul.f32 %v60, 0.03125
    %v63 = vmul.f32 %v53, %v53
    %v64 = vmul.f32 %v54, %v54
    %v65 = vsub.f32 %v61, %v63
    %v66 = vsub.f32 %v62, %v64
    %v67 = vmax.f32 %v65, 0.0
    %v68 = vmax.f32 %v66, 0.0
    %v69 = vadd.f32 %v67, 1e-05
    %v70 = vadd.f32 %v68, 1e-05
    %v71 = vrsqrt.pop %v69
    %v72 = vrsqrt.pop %v70
    %v73 = vsub.f32 %v47, %v53
    %v74 = vsub.f32 %v48, %v54
    %v75 = vmul.f32 %v73, %v71
    %v76 = vmul.f32 %v74, %v72
    %v77 = vld [vmem:[%s1] sm:$0x1]
    %v79 = vlaneseq
    %v80 = vshrl.u32 %v79, 7
    %v81 = vsub.s32 0, %v80
    %v82 = vrot.slane %v77, %v81
    %v84 = vmul.f32 %v75, %v82
    %v85 = vmul.f32 %v76, %v82
    %v86 = vpack.c.bf16 %v85, %v84
    %v87 = vld [vmem:[#allocation5] sm:$0xf]
    %v88 = vld [vmem:[#allocation5 + $0x4] sm:$0xf]
    %v89 = vld [vmem:[#allocation5 + $0x8] sm:$0xf]
    %v90 = vld [vmem:[#allocation5 + $0xc] sm:$0xf]
    %v91 = vld [vmem:[#allocation5 + $0x10] sm:$0xf]
    %v92 = vld [vmem:[#allocation5 + $0x14] sm:$0xf]
    %v93 = vld [vmem:[#allocation5 + $0x18] sm:$0xf]
    %v94 = vld [vmem:[#allocation5 + $0x1c] sm:$0xf]
    %v95 = vld [vmem:[#allocation5 + $0x20] sm:$0xf]
    %v96 = vld [vmem:[#allocation5 + $0x24] sm:$0xf]
    %v97 = vld [vmem:[#allocation5 + $0x28] sm:$0xf]
    %v98 = vld [vmem:[#allocation5 + $0x2c] sm:$0xf]
    %v99 = vld [vmem:[#allocation5 + $0x30] sm:$0xf]
    %v100 = vld [vmem:[#allocation5 + $0x34] sm:$0xf]
    %v101 = vld [vmem:[#allocation5 + $0x38] sm:$0xf]
    %v102 = vld [vmem:[#allocation5 + $0x3c] sm:$0xf]
    %v103 = vld [vmem:[%s3] sm:$0x1]
    %v105 = vlaneseq
    %v106 = vshrl.u32 %v105, 7
    %v107 = vsub.s32 0, %v106
    %v108 = vrot.slane %v103, %v107
    %v126 = vunpack.c.l.b16 %v87
    %v127 = vunpack.c.l.b16 %v88
    %v128 = vunpack.c.l.b16 %v89
    %v129 = vunpack.c.l.b16 %v90
    %v130 = vunpack.c.l.b16 %v91
    %v131 = vunpack.c.l.b16 %v92
    %v132 = vunpack.c.l.b16 %v93
    %v133 = vunpack.c.l.b16 %v94
    %v134 = vunpack.c.l.b16 %v95
    %v135 = vunpack.c.l.b16 %v96
    %v136 = vunpack.c.l.b16 %v97
    %v137 = vunpack.c.l.b16 %v98
    %v138 = vunpack.c.l.b16 %v99
    %v139 = vunpack.c.l.b16 %v100
    %v140 = vunpack.c.l.b16 %v101
    %v141 = vunpack.c.l.b16 %v102
    %v142 = vpack.c.b16 %v127, %v126
    %v143 = vpack.c.b16 %v129, %v128
    %v144 = vpack.c.b16 %v131, %v130
    %v145 = vpack.c.b16 %v133, %v132
    %v146 = vpack.c.b16 %v135, %v134
    %v147 = vpack.c.b16 %v137, %v136
    %v148 = vpack.c.b16 %v139, %v138
    %v149 = vpack.c.b16 %v141, %v140
    %158 = vmatprep.subr.bf16.mxu0 0
    %159 = vmatpush1.bf16.msra.mxu0 %v142
    %160 = vmatprep.subr.bf16.mxu0 0
    %161 = vmatpush1.bf16.msra.mxu0 %v143
    %162 = vmatprep.subr.bf16.mxu0 0
    %163 = vmatpush1.bf16.msra.mxu0 %v144
    %164 = vmatprep.subr.bf16.mxu0 0
    %165 = vmatpush1.bf16.msra.mxu0 %v145
    %166 = vmatprep.subr.bf16.mxu0 0
    %167 = vmatpush1.bf16.msra.mxu0 %v146
    %168 = vmatprep.subr.bf16.mxu0 0
    %169 = vmatpush1.bf16.msra.mxu0 %v147
    %170 = vmatprep.subr.bf16.mxu0 0
    %171 = vmatpush1.bf16.msra.mxu0 %v148
    %172 = vmatprep.subr.bf16.mxu0 0
    %173 = vmatpush1.bf16.msra.mxu0 %v149
    %174 = vmatprep.subr.bf16.mxu0 0
    %175 = vmatpush1.bf16.msra.mxu0 0
    %176 = vmatprep.subr.bf16.mxu0 0
    %177 = vmatpush1.bf16.msra.mxu0 0
    %178 = vmatprep.subr.bf16.mxu0 0
    %179 = vmatpush1.bf16.msra.mxu0 0
    %180 = vmatprep.subr.bf16.mxu0 0
    %181 = vmatpush1.bf16.msra.mxu0 0
    %182 = vmatprep.subr.bf16.mxu0 0
    %183 = vmatpush1.bf16.msra.mxu0 0
    %184 = vmatprep.subr.bf16.mxu0 0
    %185 = vmatpush1.bf16.msra.mxu0 0
    %186 = vmatprep.subr.bf16.mxu0 0
    %187 = vmatpush1.bf16.msra.mxu0 0
    %188 = vmatprep.subr.bf16.mxu0 0
    %189 = vmatpush1.bf16.msra.mxu0 0
    %190 = vmatprep.mubr.bf16.mxu0 0
    %191 = vmatmul.mubr.bf16.gmra.mrb[0].mxu0 %v86
    %v192 = vpop.f32.mrb[0].mxu0
    %v193 = vadd.f32 %v108, %v192
    %v194 = vpop.f32.mrb[0].mxu0
    %v195 = vpop.f32.mrb[0].mxu0
    %v196 = vadd.f32 %v108, %v195
    %v197 = vpop.f32.mrb[0].mxu0
    %198 = vdwg.mxu0
    %199 = vst [vmem:[#allocation7] sm:$0xff] %v193
    %200 = vst [vmem:[#allocation7 + $0x8] sm:$0xff] %v196
    // Predicated region
    $region26: #{tpu_custom_call.1} parent=1 // pred_check
      _
    $region27: #{tpu_custom_call.1} parent=1 // pred_check_branch
      %202 = sbr.rel (0) target = $region29
    $region28: #{tpu_custom_call.1} parent=1 // pred_region
      %s204 = ssub.s32 256, 256
      %205 = vsyncadd [#allocation4], %s204
      %s206 = sshll.u32 [#allocation7], 4
      %s207 = int_to_ptr.vmem [resolvable:$true] %s206
      %212 = dma.vmem_to_hbm [thread:$0]  %s207, 256, %s4, [#allocation4], 128, 128, 8
    $region29: #{tpu_custom_call.1} parent=1 // pred_fallthru
      _
    // Predicated region
    $region30: #{tpu_custom_call.1} parent=1 // pred_check
      _
    $region31: #{tpu_custom_call.1} parent=1 // pred_check_branch
      %214 = sbr.rel (0) target = $region33
    $region32: #{tpu_custom_call.1} parent=1 // pred_region
      %215 = dma.done [#allocation4], 256
    $region33: #{tpu_custom_call.1} parent=1 // pred_fallthru
      _
    %216 = vsyncpa [#allocation3], 1
    %217 = vsyncpa [#allocation6], 1
    %218 = vsyncpa [#allocation4], 1

</llo_original>
